<compile_context>
chip_gen: v6e
topology: v6e:2x2x1
jax: 0.10.0
libtpu: 0.0.40
codegen_flags: <defaults>
</compile_context>

<pallas_src>
import functools

import jax
import jax.numpy as jnp
from jax.experimental import pallas as pl
from jax.experimental.pallas import tpu as pltpu

BN_EPS = 1e-5
L2_EPS = 1e-12
_SUBLANE = 8


# --------------------------------------------------------------------------- #
# Kernels
# --------------------------------------------------------------------------- #
def _head_kernel_out1(x_ref, w1_ref, b1_ref, w2r_ref, b2_ref, o_ref):
    """dim_out == 1 path: no second MXU pass, lane-dense (1, tile_n) store."""
    # MXU matmul straight from the storage dtype (f32 or bf16), f32 accumulate.
    h = jnp.dot(x_ref[...], w1_ref[...], preferred_element_type=jnp.float32)
    h = jnp.maximum(h + b1_ref[...], 0.0)                          # (tile_n, dim_inner)

    # Fused lane reductions: squared norm + 1-wide projection (w2 as a row).
    sumsq = jnp.sum(h * h, axis=-1, keepdims=True)                 # (tile_n, 1)
    p = jnp.sum(h * w2r_ref[...], axis=-1, keepdims=True)          # (tile_n, 1)

    # Deferred L2 normalization (exact: row scaling commutes with the linear map).
    inv_nrm = jax.lax.rsqrt(jnp.maximum(sumsq, L2_EPS * L2_EPS))   # EUP
    res = p * inv_nrm + b2_ref[...]                                # (tile_n, 1)

    # Lane-dense store: (tile_n, 1) -> (1, tile_n) so the writeback is dense.
    o_ref[...] = jnp.transpose(res, (1, 0)).astype(o_ref.dtype)


def _head_kernel_general(x_ref, w1_ref, b1_ref, w2_ref, b2_ref, o_ref):
    """General dim_out path (multi-class node prediction)."""
    h = jnp.dot(x_ref[...], w1_ref[...], preferred_element_type=jnp.float32)
    h = jnp.maximum(h + b1_ref[...], 0.0)

    sumsq = jnp.sum(h * h, axis=-1, keepdims=True)
    inv_nrm = jax.lax.rsqrt(jnp.maximum(sumsq, L2_EPS * L2_EPS))

    p = jnp.dot(h, w2_ref[...], preferred_element_type=jnp.float32)
    o_ref[...] = (p * inv_nrm + b2_ref[...]).astype(o_ref.dtype)


# --------------------------------------------------------------------------- #
# Tiling
# --------------------------------------------------------------------------- #
def _round8(v):
    return max(_SUBLANE, ((v + _SUBLANE - 1) // _SUBLANE) * _SUBLANE)


def _pick_tile_n(n, dim_in, dim_inner, dim_out, x_bytes):
    """VMEM-aware node-tile size.

    Tiny n -> a single block (nothing to pipeline, removes grid-step overhead).
    Otherwise aim for >= 4 grid steps (>= 2 per TensorCore on v7x megacore) with
    tiles capped so that the double-buffered x tile + f32 temporaries +
    double-buffered parameters fit comfortably inside every generation's scoped
    VMEM default (v5e 16 MiB, v6e/v7x 32 MiB).
    """
    if n <= 1024:
        return _round8(n)
    budget = 12 * 1024 * 1024
    param_bytes = 2 * 4 * (dim_in * dim_inner + 2 * dim_inner
                           + dim_inner * dim_out + dim_out)
    per_row = (2 * dim_in * x_bytes        # double-buffered x tile
               + 4 * dim_inner             # f32 h temporary
               + 2 * 4 * max(dim_out, 1))  # double-buffered output
    cap = max(budget - param_bytes, per_row * _SUBLANE) // per_row
    cap = max(_SUBLANE, (cap // _SUBLANE) * _SUBLANE)
    tile = _round8(pl.cdiv(n, 4))          # >= 4 grid steps when there is work
    return int(min(tile, cap, 1024))


# --------------------------------------------------------------------------- #
# Wrapper
# --------------------------------------------------------------------------- #
@functools.partial(jax.jit, static_argnames=("compute_dtype",))
def gnn_inductive_node_head(x, params, compute_dtype=None):
    """Applies the post-MP MLP head to node features x of shape (N, dim_in)."""
    n, dim_in = x.shape
    w1, b1, gamma, beta, mean, var, w2, b2 = params
    dim_inner = w1.shape[1]
    dim_out = w2.shape[1]

    if compute_dtype is None:
        compute_dtype = x.dtype
    x_bytes = jnp.dtype(compute_dtype).itemsize

    # Fold eval-mode BatchNorm affine into the first Linear (tiny wrapper ops).
    bn_scale = gamma * jax.lax.rsqrt(var + BN_EPS)          # (1, dim_inner)
    w1f = (w1 * bn_scale).astype(compute_dtype)             # (dim_in, dim_inner)
    b1f = (b1 - mean) * bn_scale + beta                     # (1, dim_inner), f32
    xc = x.astype(compute_dtype)

    tile_n = _pick_tile_n(n, dim_in, dim_inner, dim_out, x_bytes)
    num_tiles = int(pl.cdiv(n, tile_n))

    # Explicit scoped-VMEM limit sized from the actual footprint (with headroom).
    footprint = (2 * tile_n * dim_in * x_bytes
                 + 2 * 4 * (dim_in * dim_inner + 2 * dim_inner
                            + dim_inner * dim_out + dim_out)
                 + 4 * tile_n * dim_inner
                 + 2 * 4 * tile_n * max(dim_out, 1))
    vmem_limit = int(min(max(2 * footprint, 16 * 1024 * 1024), 48 * 1024 * 1024))

    cost = pl.CostEstimate(
        flops=int(2 * n * dim_in * dim_inner + 2 * n * dim_inner * dim_out),
        transcendentals=int(n),  # one rsqrt per node row
        bytes_accessed=int(n * dim_in * x_bytes + n * dim_out * 4
                           + dim_in * dim_inner * x_bytes
                           + 4 * (2 * dim_inner + dim_inner * dim_out + dim_out)),
    )

    cparams = pltpu.CompilerParams(
        dimension_semantics=("parallel",),
        vmem_limit_bytes=vmem_limit,
    )

    whole = lambda i: (0, 0)

    if dim_out == 1:
        # Lane-dense output path: padded (num_tiles, 1, tile_n) slab, sliced back.
        w2_row = jnp.transpose(w2)                           # (1, dim_inner), f32
        out = pl.pallas_call(
            _head_kernel_out1,
            out_shape=jax.ShapeDtypeStruct((num_tiles, 1, tile_n), jnp.float32),
            grid_spec=pltpu.PrefetchScalarGridSpec(
                num_scalar_prefetch=0,
                grid=(num_tiles,),
                in_specs=[
                    pl.BlockSpec((tile_n, dim_in), lambda i: (i, 0)),   # x tile
                    pl.BlockSpec((dim_in, dim_inner), whole),           # W1 (BN folded)
                    pl.BlockSpec((1, dim_inner), whole),                # b1 (BN folded)
                    pl.BlockSpec((1, dim_inner), whole),                # W2 as a row
                    pl.BlockSpec((1, 1), whole),                        # b2
                ],
                out_specs=pl.BlockSpec((None, 1, tile_n), lambda i: (i, 0, 0)),
            ),
            compiler_params=cparams,
            cost_estimate=cost,
        )(xc, w1f, b1f, w2_row, b2)
        return out.reshape(num_tiles * tile_n, 1)[:n]

    # General dim_out path: padded row count, sliced back in the wrapper.
    out = pl.pallas_call(
        _head_kernel_general,
        out_shape=jax.ShapeDtypeStruct((num_tiles * tile_n, dim_out), jnp.float32),
        grid_spec=pltpu.PrefetchScalarGridSpec(
            num_scalar_prefetch=0,
            grid=(num_tiles,),
            in_specs=[
                pl.BlockSpec((tile_n, dim_in), lambda i: (i, 0)),       # x tile
                pl.BlockSpec((dim_in, dim_inner), whole),               # W1 (BN folded)
                pl.BlockSpec((1, dim_inner), whole),                    # b1 (BN folded)
                pl.BlockSpec((dim_inner, dim_out), whole),              # W2
                pl.BlockSpec((1, dim_out), whole),                      # b2
            ],
            out_specs=pl.BlockSpec((tile_n, dim_out), lambda i: (i, 0)),
        ),
        compiler_params=cparams,
        cost_estimate=cost,
    )(xc, w1f, b1f, w2, b2)
    return out[:n]


# --------------------------------------------------------------------------- #
# Parameters / reference
# --------------------------------------------------------------------------- #
def init_params(key, dim_in, dim_inner, dim_out):
    """Deterministic synthetic parameters (shapes per GraphGym MLP / LayerConfig)."""
    k1, k2, k3, k4 = jax.random.split(key, 4)
    s1 = 1.0 / jnp.sqrt(dim_in)
    s2 = 1.0 / jnp.sqrt(dim_inner)
    w1 = jax.random.uniform(k1, (dim_in, dim_inner), jnp.float32, -s1, s1)
    b1 = jax.random.uniform(k2, (1, dim_inner), jnp.float32, -s1, s1)
    w2 = jax.random.uniform(k3, (dim_inner, dim_out), jnp.float32, -s2, s2)
    b2 = jax.random.uniform(k4, (1, dim_out), jnp.float32, -s2, s2)
    gamma = jnp.ones((1, dim_inner), jnp.float32)
    beta = jnp.zeros((1, dim_inner), jnp.float32)
    mean = jnp.zeros((1, dim_inner), jnp.float32)
    var = jnp.ones((1, dim_inner), jnp.float32)
    return (w1, b1, gamma, beta, mean, var, w2, b2)


def reference(x, params):
    w1, b1, gamma, beta, mean, var, w2, b2 = params
    h = x @ w1 + b1
    h = (h - mean) * jax.lax.rsqrt(var + BN_EPS) * gamma + beta
    h = jnp.maximum(h, 0.0)
    nrm = jnp.sqrt(jnp.sum(h * h, axis=-1, keepdims=True))
    h = h / jnp.maximum(nrm, L2_EPS)
    return h @ w2 + b2


# --------------------------------------------------------------------------- #
# Demo / self-check
# --------------------------------------------------------------------------- #
if __name__ == "__main__":
    # Shapes consistent with the module: num_nodes=200, dim_in=32,
    # gnn_dim_inner=16 (config default), dim_out=1 (binary node prediction).
    num_nodes, dim_in, dim_inner, dim_out = 200, 32, 16, 1

    key = jax.random.PRNGKey(0)
    kx, ky, kp, kx2 = jax.random.split(key, 4)

    batch_x = jax.random.normal(kx, (num_nodes, dim_in), jnp.float32)
    batch_y = jax.random.randint(ky, (num_nodes,), 0, 2).astype(jnp.float32)
    params = init_params(kp, dim_in, dim_inner, dim_out)

    # forward: pred = MLP(batch.x), label = batch.y
    pred = gnn_inductive_node_head(batch_x, params)
    label = batch_y
    jax.block_until_ready((pred, label))

    ref = reference(batch_x, params)
    assert pred.shape == (num_nodes, dim_out)
    assert jnp.allclose(pred, ref, atol=1e-5, rtol=1e-5), "f32 mismatch vs reference"

    # bf16 fast path (halves x/W1 HBM traffic; native MXU bf16 on all gens).
    pred_bf16 = gnn_inductive_node_head(batch_x, params, compute_dtype=jnp.bfloat16)
    jax.block_until_ready(pred_bf16)
    assert jnp.allclose(pred_bf16, ref, atol=3e-2, rtol=3e-2), "bf16 mismatch vs reference"

    # Multi-tile + ragged tail path (grid > 1, lane-dense padded output + slice).
    n_big = 2500
    x_big = jax.random.normal(kx2, (n_big, dim_in), jnp.float32)
    pred_big = gnn_inductive_node_head(x_big, params)
    jax.block_until_ready(pred_big)
    assert pred_big.shape == (n_big, dim_out)
    assert jnp.allclose(pred_big, reference(x_big, params),
                        atol=1e-5, rtol=1e-5), "ragged/multi-tile mismatch"

    # General dim_out > 1 path (e.g. multi-class node prediction).
    params4 = init_params(kp, dim_in, dim_inner, 4)
    pred4 = gnn_inductive_node_head(batch_x, params4)
    jax.block_until_ready(pred4)
    assert pred4.shape == (num_nodes, 4)
    assert jnp.allclose(pred4, reference(batch_x, params4),
                        atol=1e-5, rtol=1e-5), "dim_out>1 mismatch"

    print("KERNEL_OK")
</pallas_src>

<mosaic_0001>
module attributes {stable_mosaic.version = 11 : i64} {
  func.func @_head_kernel_out1(%arg0: i32, %arg1: memref<200x32xf32, #tpu.memory_space<vmem>>, %arg2: memref<32x16xf32, #tpu.memory_space<vmem>>, %arg3: memref<1x16xf32, #tpu.memory_space<vmem>>, %arg4: memref<1x16xf32, #tpu.memory_space<vmem>>, %arg5: memref<1x1xf32, #tpu.memory_space<vmem>>, %arg6: memref<1x1x200xf32, #tpu.memory_space<vmem>>) attributes {dimension_semantics = [#tpu.dimension_semantics<parallel>], iteration_bounds = array<i64: 1>, scalar_prefetch = 0 : i64, scratch_operands = 0 : i64, tpu.core_type = #tpu.core_type<tc>, window_params = [{transform_indices = @transform_0, window_bounds = array<i64: 200, 32>}, {pipeline_mode = #tpu.pipeline_mode<synchronous>, transform_indices = @transform_1, window_bounds = array<i64: 32, 16>}, {pipeline_mode = #tpu.pipeline_mode<synchronous>, transform_indices = @transform_2, window_bounds = array<i64: 1, 16>}, {pipeline_mode = #tpu.pipeline_mode<synchronous>, transform_indices = @transform_3, window_bounds = array<i64: 1, 16>}, {pipeline_mode = #tpu.pipeline_mode<synchronous>, transform_indices = @transform_4, window_bounds = array<i64: 1, 1>}, {transform_indices = @transform_5, window_bounds = array<i64: 1, 1, 200>}]} {
    %c0 = arith.constant 0 : index
    %c0_0 = arith.constant 0 : index
    %0 = vector.load %arg1[%c0, %c0_0] : memref<200x32xf32, #tpu.memory_space<vmem>>, vector<200x32xf32>
    %c0_1 = arith.constant 0 : index
    %c0_2 = arith.constant 0 : index
    %1 = vector.load %arg2[%c0_1, %c0_2] : memref<32x16xf32, #tpu.memory_space<vmem>>, vector<32x16xf32>
    %cst = arith.constant dense<0.000000e+00> : vector<200x16xf32>
    %2 = tpu.matmul %0, %1, %cst {dimension_numbers = #tpu.dot_dimension_numbers<[1], [0], [0], [1], [0, 0, 1, 1], [], []>} : vector<200x32xf32>, vector<32x16xf32>, vector<200x16xf32> -> vector<200x16xf32>
    %c0_3 = arith.constant 0 : index
    %c0_4 = arith.constant 0 : index
    %3 = vector.load %arg3[%c0_3, %c0_4] : memref<1x16xf32, #tpu.memory_space<vmem>>, vector<1x16xf32>
    %4 = vector.broadcast %3 : vector<1x16xf32> to vector<200x16xf32>
    %5 = arith.addf %2, %4 : vector<200x16xf32>
    %cst_5 = arith.constant 0.000000e+00 : f32
    %6 = vector.broadcast %cst_5 : f32 to vector<200x16xf32>
    %7 = arith.maximumf %5, %6 : vector<200x16xf32>
    %8 = arith.mulf %7, %7 : vector<200x16xf32>
    %cst_6 = arith.constant dense<0.000000e+00> : vector<200xf32>
    %9 = vector.multi_reduction <add>, %8, %cst_6 [1] : vector<200x16xf32> to vector<200xf32>
    %10 = vector.shape_cast %9 : vector<200xf32> to vector<200x1xf32>
    %c0_7 = arith.constant 0 : index
    %c0_8 = arith.constant 0 : index
    %11 = vector.load %arg4[%c0_7, %c0_8] : memref<1x16xf32, #tpu.memory_space<vmem>>, vector<1x16xf32>
    %12 = vector.broadcast %11 : vector<1x16xf32> to vector<200x16xf32>
    %13 = arith.mulf %7, %12 : vector<200x16xf32>
    %cst_9 = arith.constant dense<0.000000e+00> : vector<200xf32>
    %14 = vector.multi_reduction <add>, %13, %cst_9 [1] : vector<200x16xf32> to vector<200xf32>
    %15 = vector.shape_cast %14 : vector<200xf32> to vector<200x1xf32>
    %cst_10 = arith.constant 1.000000e-24 : f32
    %16 = vector.broadcast %cst_10 : f32 to vector<200x1xf32>
    %17 = arith.maximumf %10, %16 : vector<200x1xf32>
    %18 = math.rsqrt %17 : vector<200x1xf32>
    %19 = arith.mulf %15, %18 : vector<200x1xf32>
    %c0_11 = arith.constant 0 : index
    %c0_12 = arith.constant 0 : index
    %20 = vector.load %arg5[%c0_11, %c0_12] : memref<1x1xf32, #tpu.memory_space<vmem>>, vector<1x1xf32>
    %21 = vector.broadcast %20 : vector<1x1xf32> to vector<200x1xf32>
    %22 = arith.addf %19, %21 : vector<200x1xf32>
    %23 = tpu.transpose %22, [1, 0] : vector<200x1xf32> -> vector<1x200xf32>
    %c0_13 = arith.constant 0 : index
    %c0_14 = arith.constant 0 : index
    %c0_15 = arith.constant 0 : index
    %24 = vector.load %arg6[%c0_13, %c0_14, %c0_15] : memref<1x1x200xf32, #tpu.memory_space<vmem>>, vector<1x1x200xf32>
    %25 = vector.shape_cast %24 : vector<1x1x200xf32> to vector<1x200xf32>
    %26 = vector.shape_cast %23 : vector<1x200xf32> to vector<1x1x200xf32>
    tpu.vector_store %arg6[%c0_13, %c0_14, %c0_15], %26 {strides = array<i32>} : memref<1x1x200xf32, #tpu.memory_space<vmem>>, vector<1x1x200xf32>,
    return
  }
  func.func @transform_0(%arg0: i32) -> (i32, i32) {
    %c0_i32 = arith.constant 0 : i32
    %c0_i32_0 = arith.constant 0 : i32
    return %arg0, %c0_i32 : i32, i32
  }
  func.func @transform_1(%arg0: i32) -> (i32, i32) {
    %c0_i32 = arith.constant 0 : i32
    %c0_i32_0 = arith.constant 0 : i32
    %c0_i32_1 = arith.constant 0 : i32
    return %c0_i32, %c0_i32_0 : i32, i32
  }
  func.func @transform_2(%arg0: i32) -> (i32, i32) {
    %c0_i32 = arith.constant 0 : i32
    %c0_i32_0 = arith.constant 0 : i32
    %c0_i32_1 = arith.constant 0 : i32
    return %c0_i32, %c0_i32_0 : i32, i32
  }
  func.func @transform_3(%arg0: i32) -> (i32, i32) {
    %c0_i32 = arith.constant 0 : i32
    %c0_i32_0 = arith.constant 0 : i32
    %c0_i32_1 = arith.constant 0 : i32
    return %c0_i32, %c0_i32_0 : i32, i32
  }
  func.func @transform_4(%arg0: i32) -> (i32, i32) {
    %c0_i32 = arith.constant 0 : i32
    %c0_i32_0 = arith.constant 0 : i32
    %c0_i32_1 = arith.constant 0 : i32
    return %c0_i32, %c0_i32_0 : i32, i32
  }
  func.func @transform_5(%arg0: i32) -> (i32, i32, i32) {
    %c0_i32 = arith.constant 0 : i32
    %c0_i32_0 = arith.constant 0 : i32
    %c0_i32_1 = arith.constant 0 : i32
    return %arg0, %c0_i32, %c0_i32_0 : i32, i32, i32
  }
}

</mosaic_0001>

<llo_original>
// kernel: gnn_inductive_node_head.1
$region0: #{gnn_inductive_node_head.1}
  #allocation0 [shape = 'u32[]', space=smem, size = 0x4, offset = 0x4, fixed_abs, tag = 'smem constant byte address 0x4 - core index']
  #allocation1 [shape = 'u32[144,128]{1,0:T(1,128)}', space=vmem, size = 0x12000, scoped, tag = 'internal scratch']
  #allocation2 [shape = 'f32[1,1]{1,0:T(1,128)S(1)}', space=vmem, size = 0x200, scoped, tag = 'scoped memory for gnn_inductive_node_head.1']
  %s0 = inlined_call_operand.vmem [shape: f32[200,32], index: 0, kind: input, shape index: {}]
  %s1 = inlined_call_operand.vmem [shape: f32[32,16], index: 1, kind: input, shape index: {}]
  %s2 = inlined_call_operand.vmem [shape: f32[1,16], index: 2, kind: input, shape index: {}]
  %s3 = inlined_call_operand.vmem [shape: f32[1,16], index: 3, kind: input, shape index: {}]
  %s4 = inlined_call_operand.<no memory space> [shape: f32[1,1], index: 4, kind: input, shape index: {}]
  %s5 = inlined_call_operand.hbm [shape: f32[1,1,200], index: 5, kind: output, shape index: {}]
  %s6 = sld [smem:[#allocation0]]
  $region30: #{gnn_inductive_node_head.1} parent=0
    _
  %s8 = ssub.s32 1, %s6
  %s9 = scalar_select 0, %s8, %s6
  %v10 = vstv %s4
  %11 = vst [vmem:[#allocation2] sm:$0x1] %v10
  $region1: #{gnn_inductive_node_head.1} parent=0
    #allocation3 [shape = 'u8[1024]{0}', space=vmem, size = 0x400, scoped, tag = 'output window, operand 0, single buffered']
    #allocation4 [shape = 's32[1]{0}', space=sflag, size = 0x4, scoped, tag = 'scoped memory for gnn_inductive_node_head.1']
    %12 = vsyncpa [#allocation4], 0
    // Predicated region
    $region2: #{gnn_inductive_node_head.1} parent=1 // pred_check
      _
    $region3: #{gnn_inductive_node_head.1} parent=1 // pred_check_branch
      %14 = sbr.rel (0) target = $region5
    $region4: #{gnn_inductive_node_head.1} parent=1 // pred_region
      _
    $region5: #{gnn_inductive_node_head.1} parent=1 // pred_fallthru
      _
    // Predicated region
    $region6: #{gnn_inductive_node_head.1} parent=1 // pred_check
      _
    $region7: #{gnn_inductive_node_head.1} parent=1 // pred_check_branch
      %16 = sbr.rel (0) target = $region9
    $region8: #{gnn_inductive_node_head.1} parent=1 // pred_region
      _
    $region9: #{gnn_inductive_node_head.1} parent=1 // pred_fallthru
      _
    // Predicated region
    $region10: #{gnn_inductive_node_head.1} parent=1 // pred_check
      _
    $region11: #{gnn_inductive_node_head.1} parent=1 // pred_check_branch
      %18 = sbr.rel (0) target = $region13
    $region12: #{gnn_inductive_node_head.1} parent=1 // pred_region
      _
    $region13: #{gnn_inductive_node_head.1} parent=1 // pred_fallthru
      _
    // Predicated region
    $region14: #{gnn_inductive_node_head.1} parent=1 // pred_check
      _
    $region15: #{gnn_inductive_node_head.1} parent=1 // pred_check_branch
      %20 = sbr.rel (0) target = $region17
    $region16: #{gnn_inductive_node_head.1} parent=1 // pred_region
      _
    $region17: #{gnn_inductive_node_head.1} parent=1 // pred_fallthru
      _
    // Predicated region
    $region18: #{gnn_inductive_node_head.1} parent=1 // pred_check
      _
    $region19: #{gnn_inductive_node_head.1} parent=1 // pred_check_branch
      %22 = sbr.rel (0) target = $region21
    $region20: #{gnn_inductive_node_head.1} parent=1 // pred_region
      _
    $region21: #{gnn_inductive_node_head.1} parent=1 // pred_fallthru
      _
    %v23 = vld [vmem:[%s0] sm:$0xff]
    %v24 = vld [vmem:[%s0 + $0x8] sm:$0xff]
    %v25 = vld [vmem:[%s0 + $0x10] sm:$0xff]
    %v26 = vld [vmem:[%s0 + $0x18] sm:$0xff]
    %v27 = vld [vmem:[%s0 + $0x20] sm:$0xff]
    %v28 = vld [vmem:[%s0 + $0x28] sm:$0xff]
    %v29 = vld [vmem:[%s0 + $0x30] sm:$0xff]
    %v30 = vld [vmem:[%s0 + $0x38] sm:$0xff]
    %v31 = vld [vmem:[%s0 + $0x40] sm:$0xff]
    %v32 = vld [vmem:[%s0 + $0x48] sm:$0xff]
    %v33 = vld [vmem:[%s0 + $0x50] sm:$0xff]
    %v34 = vld [vmem:[%s0 + $0x58] sm:$0xff]
    %v35 = vld [vmem:[%s0 + $0x60] sm:$0xff]
    %v36 = vld [vmem:[%s0 + $0x68] sm:$0xff]
    %v37 = vld [vmem:[%s0 + $0x70] sm:$0xff]
    %v38 = vld [vmem:[%s0 + $0x78] sm:$0xff]
    %v39 = vld [vmem:[%s0 + $0x80] sm:$0xff]
    %v40 = vld [vmem:[%s0 + $0x88] sm:$0xff]
    %v41 = vld [vmem:[%s0 + $0x90] sm:$0xff]
    %v42 = vld [vmem:[%s0 + $0x98] sm:$0xff]
    %v43 = vld [vmem:[%s0 + $0xa0] sm:$0xff]
    %v44 = vld [vmem:[%s0 + $0xa8] sm:$0xff]
    %v45 = vld [vmem:[%s0 + $0xb0] sm:$0xff]
    %v46 = vld [vmem:[%s0 + $0xb8] sm:$0xff]
    %v47 = vld [vmem:[%s0 + $0xc0] sm:$0xff]
    %v48 = vld [vmem:[%s1] sm:$0xff]
    %v49 = vld [vmem:[%s1 + $0x8] sm:$0xff]
    %v50 = vld [vmem:[%s1 + $0x10] sm:$0xff]
    %v51 = vld [vmem:[%s1 + $0x18] sm:$0xff]
    %v52 = vld [vmem:[%s2] sm:$0x1]
    %v54 = vlaneseq
    %v55 = vshrl.u32 %v54, 7
    %v56 = vsub.s32 0, %v55
    %v57 = vrot.slane %v52, %v56
    %vm59 = vcmask 261120
    %v61 = vsel %vm59, %v23, 0
    %v64 = vsel %vm59, %v24, 0
    %v67 = vsel %vm59, %v25, 0
    %v70 = vsel %vm59, %v26, 0
    %v73 = vsel %vm59, %v27, 0
    %v76 = vsel %vm59, %v28, 0
    %v79 = vsel %vm59, %v29, 0
    %v82 = vsel %vm59, %v30, 0
    %v85 = vsel %vm59, %v31, 0
    %v88 = vsel %vm59, %v32, 0
    %v91 = vsel %vm59, %v33, 0
    %v94 = vsel %vm59, %v34, 0
    %v97 = vsel %vm59, %v35, 0
    %v100 = vsel %vm59, %v36, 0
    %v103 = vsel %vm59, %v37, 0
    %v106 = vsel %vm59, %v38, 0
    %v109 = vsel %vm59, %v39, 0
    %v112 = vsel %vm59, %v40, 0
    %v115 = vsel %vm59, %v41, 0
    %v118 = vsel %vm59, %v42, 0
    %v121 = vsel %vm59, %v43, 0
    %v124 = vsel %vm59, %v44, 0
    %v127 = vsel %vm59, %v45, 0
    %v130 = vsel %vm59, %v46, 0
    %v133 = vsel %vm59, %v47, 0
    %135 = vmatprep.subr.mxu0 0.0
    %136 = vmatpush1.msra.mxu0 0.0
    %137 = vmatprep.subr.mxu0 0.0
    %138 = vmatpush1.msra.mxu0 0.0
    %139 = vmatprep.subr.mxu0 0.0
    %140 = vmatpush1.msra.mxu0 0.0
    %141 = vmatprep.subr.mxu0 0.0
    %142 = vmatpush1.msra.mxu0 0.0
    %143 = vmatprep.subr.mxu0 0.0
    %144 = vmatpush1.msra.mxu0 0.0
    %145 = vmatprep.subr.mxu0 0.0
    %146 = vmatpush1.msra.mxu0 0.0
    %147 = vmatprep.subr.mxu0 0.0
    %148 = vmatpush1.msra.mxu0 0.0
    %149 = vmatprep.subr.mxu0 0.0
    %150 = vmatpush1.msra.mxu0 0.0
    %151 = vmatprep.subr.mxu0 0.0
    %152 = vmatpush1.msra.mxu0 0.0
    %153 = vmatprep.subr.mxu0 0.0
    %154 = vmatpush1.msra.mxu0 0.0
    %155 = vmatprep.subr.mxu0 0.0
    %156 = vmatpush1.msra.mxu0 0.0
    %157 = vmatprep.subr.mxu0 0.0
    %158 = vmatpush1.msra.mxu0 0.0
    %159 = vmatprep.subr.mxu0 0.0
    %160 = vmatpush1.msra.mxu0 %v51
    %161 = vmatprep.subr.mxu0 0.0
    %162 = vmatpush1.msra.mxu0 %v50
    %163 = vmatprep.subr.mxu0 0.0
    %164 = vmatpush1.msra.mxu0 %v49
    %165 = vmatprep.subr.mxu0 0.0
    %166 = vmatpush1.msra.mxu0 %v48
    %167 = vmatprep.subr.mxu0 0.0
    %168 = vmatpush2.msra.mxu0 0.0
    %169 = vmatprep.subr.mxu0 0.0
    %170 = vmatpush2.msra.mxu0 0.0
    %171 = vmatprep.subr.mxu0 0.0
    %172 = vmatpush2.msra.mxu0 0.0
    %173 = vmatprep.subr.mxu0 0.0
    %174 = vmatpush2.msra.mxu0 0.0
    %175 = vmatprep.subr.mxu0 0.0
    %176 = vmatpush2.msra.mxu0 0.0
    %177 = vmatprep.subr.mxu0 0.0
    %178 = vmatpush2.msra.mxu0 0.0
    %179 = vmatprep.subr.mxu0 0.0
    %180 = vmatpush2.msra.mxu0 0.0
    %181 = vmatprep.subr.mxu0 0.0
    %182 = vmatpush2.msra.mxu0 0.0
    %183 = vmatprep.subr.mxu0 0.0
    %184 = vmatpush2.msra.mxu0 0.0
    %185 = vmatprep.subr.mxu0 0.0
    %186 = vmatpush2.msra.mxu0 0.0
    %187 = vmatprep.subr.mxu0 0.0
    %188 = vmatpush2.msra.mxu0 0.0
    %189 = vmatprep.subr.mxu0 0.0
    %190 = vmatpush2.msra.mxu0 0.0
    %191 = vmatprep.subr.mxu0 0.0
    %192 = vmatpush2.msra.mxu0 0.0
    %193 = vmatprep.subr.mxu0 0.0
    %194 = vmatpush2.msra.mxu0 0.0
    %195 = vmatprep.subr.mxu0 0.0
    %196 = vmatpush2.msra.mxu0 0.0
    %197 = vmatprep.subr.mxu0 0.0
    %198 = vmatpush2.msra.mxu0 0.0
    %199 = vmatprep.mubr.f32.mxu0 0.0
    %200 = vmatmul.mubr.f32.gmra.mxu0 %v61
    %v201 = vpop.f32.mrf.mxu0
    %v202 = vadd.f32 %v57, %v201
    %v203 = vpop.f32.mrf.mxu0
    %204 = vmatprep.mubr.f32.mxu0 0.0
    %205 = vmatmul.mubr.f32.gmra.mxu0 %v64
    %v206 = vpop.f32.mrf.mxu0
    %v207 = vadd.f32 %v57, %v206
    %v208 = vpop.f32.mrf.mxu0
    %209 = vmatprep.mubr.f32.mxu0 0.0
    %210 = vmatmul.mubr.f32.gmra.mxu0 %v67
    %v211 = vpop.f32.mrf.mxu0
    %v212 = vadd.f32 %v57, %v211
    %v213 = vpop.f32.mrf.mxu0
    %214 = vmatprep.mubr.f32.mxu0 0.0
    %215 = vmatmul.mubr.f32.gmra.mxu0 %v70
    %v216 = vpop.f32.mrf.mxu0
    %v217 = vadd.f32 %v57, %v216
    %v218 = vpop.f32.mrf.mxu0
    %219 = vmatprep.mubr.f32.mxu0 0.0
    %220 = vmatmul.mubr.f32.gmra.mxu0 %v73
    %v221 = vpop.f32.mrf.mxu0
    %v222 = vadd.f32 %v57, %v221
    %v223 = vpop.f32.mrf.mxu0
    %224 = vmatprep.mubr.f32.mxu0 0.0
    %225 = vmatmul.mubr.f32.gmra.mxu0 %v76
    %v226 = vpop.f32.mrf.mxu0
    %v227 = vadd.f32 %v57, %v226
    %v228 = vpop.f32.mrf.mxu0
    %229 = vmatprep.mubr.f32.mxu0 0.0
    %230 = vmatmul.mubr.f32.gmra.mxu0 %v79
    %v231 = vpop.f32.mrf.mxu0
    %v232 = vadd.f32 %v57, %v231
    %v233 = vpop.f32.mrf.mxu0
    %234 = vmatprep.mubr.f32.mxu0 0.0
    %235 = vmatmul.mubr.f32.gmra.mxu0 %v82
    %v236 = vpop.f32.mrf.mxu0
    %v237 = vadd.f32 %v57, %v236
    %v238 = vpop.f32.mrf.mxu0
    %239 = vmatprep.mubr.f32.mxu0 0.0
    %240 = vmatmul.mubr.f32.gmra.mxu0 %v85
    %v241 = vpop.f32.mrf.mxu0
    %v242 = vadd.f32 %v57, %v241
    %v243 = vpop.f32.mrf.mxu0
    %244 = vmatprep.mubr.f32.mxu0 0.0
    %245 = vmatmul.mubr.f32.gmra.mxu0 %v88
    %v246 = vpop.f32.mrf.mxu0
    %v247 = vadd.f32 %v57, %v246
    %v248 = vpop.f32.mrf.mxu0
    %249 = vmatprep.mubr.f32.mxu0 0.0
    %250 = vmatmul.mubr.f32.gmra.mxu0 %v91
    %v251 = vpop.f32.mrf.mxu0
    %v252 = vadd.f32 %v57, %v251
    %v253 = vpop.f32.mrf.mxu0
    %254 = vmatprep.mubr.f32.mxu0 0.0
    %255 = vmatmul.mubr.f32.gmra.mxu0 %v94
    %v256 = vpop.f32.mrf.mxu0
    %v257 = vadd.f32 %v57, %v256
    %v258 = vpop.f32.mrf.mxu0
    %259 = vmatprep.mubr.f32.mxu0 0.0
    %260 = vmatmul.mubr.f32.gmra.mxu0 %v97
    %v261 = vpop.f32.mrf.mxu0
    %v262 = vadd.f32 %v57, %v261
    %v263 = vpop.f32.mrf.mxu0
    %264 = vmatprep.mubr.f32.mxu0 0.0
    %265 = vmatmul.mubr.f32.gmra.mxu0 %v100
    %v266 = vpop.f32.mrf.mxu0
    %v267 = vadd.f32 %v57, %v266
    %v268 = vpop.f32.mrf.mxu0
    %269 = vmatprep.mubr.f32.mxu0 0.0
    %270 = vmatmul.mubr.f32.gmra.mxu0 %v103
    %v271 = vpop.f32.mrf.mxu0
    %v272 = vadd.f32 %v57, %v271
    %v273 = vpop.f32.mrf.mxu0
    %274 = vmatprep.mubr.f32.mxu0 0.0
    %275 = vmatmul.mubr.f32.gmra.mxu0 %v106
    %v276 = vpop.f32.mrf.mxu0
    %v277 = vadd.f32 %v57, %v276
    %v278 = vpop.f32.mrf.mxu0
    %279 = vmatprep.mubr.f32.mxu0 0.0
    %280 = vmatmul.mubr.f32.gmra.mxu0 %v109
    %v281 = vpop.f32.mrf.mxu0
    %v282 = vadd.f32 %v57, %v281
    %v283 = vpop.f32.mrf.mxu0
    %284 = vmatprep.mubr.f32.mxu0 0.0
    %285 = vmatmul.mubr.f32.gmra.mxu0 %v112
    %v286 = vpop.f32.mrf.mxu0
    %v287 = vadd.f32 %v57, %v286
    %v288 = vpop.f32.mrf.mxu0
    %289 = vmatprep.mubr.f32.mxu0 0.0
    %290 = vmatmul.mubr.f32.gmra.mxu0 %v115
    %v291 = vpop.f32.mrf.mxu0
    %v292 = vadd.f32 %v57, %v291
    %v293 = vpop.f32.mrf.mxu0
    %294 = vmatprep.mubr.f32.mxu0 0.0
    %295 = vmatmul.mubr.f32.gmra.mxu0 %v118
    %v296 = vpop.f32.mrf.mxu0
    %v297 = vadd.f32 %v57, %v296
    %v298 = vpop.f32.mrf.mxu0
    %299 = vmatprep.mubr.f32.mxu0 0.0
    %300 = vmatmul.mubr.f32.gmra.mxu0 %v121
    %v301 = vpop.f32.mrf.mxu0
    %v302 = vadd.f32 %v57, %v301
    %v303 = vpop.f32.mrf.mxu0
    %304 = vmatprep.mubr.f32.mxu0 0.0
    %305 = vmatmul.mubr.f32.gmra.mxu0 %v124
    %v306 = vpop.f32.mrf.mxu0
    %v307 = vadd.f32 %v57, %v306
    %v308 = vpop.f32.mrf.mxu0
    %309 = vmatprep.mubr.f32.mxu0 0.0
    %310 = vmatmul.mubr.f32.gmra.mxu0 %v127
    %v311 = vpop.f32.mrf.mxu0
    %v312 = vadd.f32 %v57, %v311
    %v313 = vpop.f32.mrf.mxu0
    %314 = vmatprep.mubr.f32.mxu0 0.0
    %315 = vmatmul.mubr.f32.gmra.mxu0 %v130
    %v316 = vpop.f32.mrf.mxu0
    %v317 = vadd.f32 %v57, %v316
    %v318 = vpop.f32.mrf.mxu0
    %319 = vmatprep.mubr.f32.mxu0 0.0
    %320 = vmatmul.mubr.f32.gmra.mxu0 %v133
    %v321 = vpop.f32.mrf.mxu0
    %v322 = vadd.f32 %v57, %v321
    %v323 = vpop.f32.mrf.mxu0
    %324 = vdwg.mxu0
    %v325 = vmax.f32 %v202, 0.0
    %v326 = vmax.f32 %v207, 0.0
    %v327 = vmax.f32 %v212, 0.0
    %v328 = vmax.f32 %v217, 0.0
    %v329 = vmax.f32 %v222, 0.0
    %v330 = vmax.f32 %v227, 0.0
    %v331 = vmax.f32 %v232, 0.0
    %v332 = vmax.f32 %v237, 0.0
    %v333 = vmax.f32 %v242, 0.0
    %v334 = vmax.f32 %v247, 0.0
    %v335 = vmax.f32 %v252, 0.0
    %v336 = vmax.f32 %v257, 0.0
    %v337 = vmax.f32 %v262, 0.0
    %v338 = vmax.f32 %v267, 0.0
    %v339 = vmax.f32 %v272, 0.0
    %v340 = vmax.f32 %v277, 0.0
    %v341 = vmax.f32 %v282, 0.0
    %v342 = vmax.f32 %v287, 0.0
    %v343 = vmax.f32 %v292, 0.0
    %v344 = vmax.f32 %v297, 0.0
    %v345 = vmax.f32 %v302, 0.0
    %v346 = vmax.f32 %v307, 0.0
    %v347 = vmax.f32 %v312, 0.0
    %v348 = vmax.f32 %v317, 0.0
    %v349 = vmax.f32 %v322, 0.0
    %v350 = vmul.f32 %v325, %v325
    %v351 = vmul.f32 %v326, %v326
    %v352 = vmul.f32 %v327, %v327
    %v353 = vmul.f32 %v328, %v328
    %v354 = vmul.f32 %v329, %v329
    %v355 = vmul.f32 %v330, %v330
    %v356 = vmul.f32 %v331, %v331
    %v357 = vmul.f32 %v332, %v332
    %v358 = vmul.f32 %v333, %v333
    %v359 = vmul.f32 %v334, %v334
    %v360 = vmul.f32 %v335, %v335
    %v361 = vmul.f32 %v336, %v336
    %v362 = vmul.f32 %v337, %v337
    %v363 = vmul.f32 %v338, %v338
    %v364 = vmul.f32 %v339, %v339
    %v365 = vmul.f32 %v340, %v340
    %v366 = vmul.f32 %v341, %v341
    %v367 = vmul.f32 %v342, %v342
    %v368 = vmul.f32 %v343, %v343
    %v369 = vmul.f32 %v344, %v344
    %v370 = vmul.f32 %v345, %v345
    %v371 = vmul.f32 %v346, %v346
    %v372 = vmul.f32 %v347, %v347
    %v373 = vmul.f32 %v348, %v348
    %v374 = vmul.f32 %v349, %v349
    %vm375 = vcmask 130048
    %v376 = vsel %vm375, %v350, 0.0
    %377 = vadd.xlane.f32.xlu0 %v376
    %v378 = vpop.xlane.xlu0 %377
    %v379 = vsel %vm375, %v351, 0.0
    %380 = vadd.xlane.f32.xlu0 %v379
    %v381 = vpop.xlane.xlu0 %380
    %v382 = vsel %vm375, %v352, 0.0
    %383 = vadd.xlane.f32.xlu0 %v382
    %v384 = vpop.xlane.xlu0 %383
    %v385 = vsel %vm375, %v353, 0.0
    %386 = vadd.xlane.f32.xlu0 %v385
    %v387 = vpop.xlane.xlu0 %386
    %v388 = vsel %vm375, %v354, 0.0
    %389 = vadd.xlane.f32.xlu0 %v388
    %v390 = vpop.xlane.xlu0 %389
    %v391 = vsel %vm375, %v355, 0.0
    %392 = vadd.xlane.f32.xlu0 %v391
    %v393 = vpop.xlane.xlu0 %392
    %v394 = vsel %vm375, %v356, 0.0
    %395 = vadd.xlane.f32.xlu0 %v394
    %v396 = vpop.xlane.xlu0 %395
    %v397 = vsel %vm375, %v357, 0.0
    %398 = vadd.xlane.f32.xlu0 %v397
    %v399 = vpop.xlane.xlu0 %398
    %v400 = vsel %vm375, %v358, 0.0
    %401 = vadd.xlane.f32.xlu0 %v400
    %v402 = vpop.xlane.xlu0 %401
    %v403 = vsel %vm375, %v359, 0.0
    %404 = vadd.xlane.f32.xlu0 %v403
    %v405 = vpop.xlane.xlu0 %404
    %v406 = vsel %vm375, %v360, 0.0
    %407 = vadd.xlane.f32.xlu0 %v406
    %v408 = vpop.xlane.xlu0 %407
    %v409 = vsel %vm375, %v361, 0.0
    %410 = vadd.xlane.f32.xlu0 %v409
    %v411 = vpop.xlane.xlu0 %410
    %v412 = vsel %vm375, %v362, 0.0
    %413 = vadd.xlane.f32.xlu0 %v412
    %v414 = vpop.xlane.xlu0 %413
    %v415 = vsel %vm375, %v363, 0.0
    %416 = vadd.xlane.f32.xlu0 %v415
    %v417 = vpop.xlane.xlu0 %416
    %v418 = vsel %vm375, %v364, 0.0
    %419 = vadd.xlane.f32.xlu0 %v418
    %v420 = vpop.xlane.xlu0 %419
    %v421 = vsel %vm375, %v365, 0.0
    %422 = vadd.xlane.f32.xlu0 %v421
    %v423 = vpop.xlane.xlu0 %422
    %v424 = vsel %vm375, %v366, 0.0
    %425 = vadd.xlane.f32.xlu0 %v424
    %v426 = vpop.xlane.xlu0 %425
    %v427 = vsel %vm375, %v367, 0.0
    %428 = vadd.xlane.f32.xlu0 %v427
    %v429 = vpop.xlane.xlu0 %428
    %v430 = vsel %vm375, %v368, 0.0
    %431 = vadd.xlane.f32.xlu0 %v430
    %v432 = vpop.xlane.xlu0 %431
    %v433 = vsel %vm375, %v369, 0.0
    %434 = vadd.xlane.f32.xlu0 %v433
    %v435 = vpop.xlane.xlu0 %434
    %v436 = vsel %vm375, %v370, 0.0
    %437 = vadd.xlane.f32.xlu0 %v436
    %v438 = vpop.xlane.xlu0 %437
    %v439 = vsel %vm375, %v371, 0.0
    %440 = vadd.xlane.f32.xlu0 %v439
    %v441 = vpop.xlane.xlu0 %440
    %v442 = vsel %vm375, %v372, 0.0
    %443 = vadd.xlane.f32.xlu0 %v442
    %v444 = vpop.xlane.xlu0 %443
    %v445 = vsel %vm375, %v373, 0.0
    %446 = vadd.xlane.f32.xlu0 %v445
    %v447 = vpop.xlane.xlu0 %446
    %v448 = vsel %vm375, %v374, 0.0
    %449 = vadd.xlane.f32.xlu0 %v448
    %v450 = vpop.xlane.xlu0 %449
    %v451 = vld [vmem:[%s3] sm:$0x1]
    %v453 = vlaneseq
    %v454 = vshrl.u32 %v453, 7
    %v455 = vsub.s32 0, %v454
    %v456 = vrot.slane %v451, %v455
    %v458 = vmul.f32 %v325, %v456
    %v459 = vmul.f32 %v326, %v456
    %v460 = vmul.f32 %v327, %v456
    %v461 = vmul.f32 %v328, %v456
    %v462 = vmul.f32 %v329, %v456
    %v463 = vmul.f32 %v330, %v456
    %v464 = vmul.f32 %v331, %v456
    %v465 = vmul.f32 %v332, %v456
    %v466 = vmul.f32 %v333, %v456
    %v467 = vmul.f32 %v334, %v456
    %v468 = vmul.f32 %v335, %v456
    %v469 = vmul.f32 %v336, %v456
    %v470 = vmul.f32 %v337, %v456
    %v471 = vmul.f32 %v338, %v456
    %v472 = vmul.f32 %v339, %v456
    %v473 = vmul.f32 %v340, %v456
    %v474 = vmul.f32 %v341, %v456
    %v475 = vmul.f32 %v342, %v456
    %v476 = vmul.f32 %v343, %v456
    %v477 = vmul.f32 %v344, %v456
    %v478 = vmul.f32 %v345, %v456
    %v479 = vmul.f32 %v346, %v456
    %v480 = vmul.f32 %v347, %v456
    %v481 = vmul.f32 %v348, %v456
    %v482 = vmul.f32 %v349, %v456
    %v483 = vsel %vm375, %v458, 0.0
    %484 = vadd.xlane.f32.xlu0 %v483
    %v485 = vpop.xlane.xlu0 %484
    %v486 = vsel %vm375, %v459, 0.0
    %487 = vadd.xlane.f32.xlu0 %v486
    %v488 = vpop.xlane.xlu0 %487
    %v489 = vsel %vm375, %v460, 0.0
    %490 = vadd.xlane.f32.xlu0 %v489
    %v491 = vpop.xlane.xlu0 %490
    %v492 = vsel %vm375, %v461, 0.0
    %493 = vadd.xlane.f32.xlu0 %v492
    %v494 = vpop.xlane.xlu0 %493
    %v495 = vsel %vm375, %v462, 0.0
    %496 = vadd.xlane.f32.xlu0 %v495
    %v497 = vpop.xlane.xlu0 %496
    %v498 = vsel %vm375, %v463, 0.0
    %499 = vadd.xlane.f32.xlu0 %v498
    %v500 = vpop.xlane.xlu0 %499
    %v501 = vsel %vm375, %v464, 0.0
    %502 = vadd.xlane.f32.xlu0 %v501
    %v503 = vpop.xlane.xlu0 %502
    %v504 = vsel %vm375, %v465, 0.0
    %505 = vadd.xlane.f32.xlu0 %v504
    %v506 = vpop.xlane.xlu0 %505
    %v507 = vsel %vm375, %v466, 0.0
    %508 = vadd.xlane.f32.xlu0 %v507
    %v509 = vpop.xlane.xlu0 %508
    %v510 = vsel %vm375, %v467, 0.0
    %511 = vadd.xlane.f32.xlu0 %v510
    %v512 = vpop.xlane.xlu0 %511
    %v513 = vsel %vm375, %v468, 0.0
    %514 = vadd.xlane.f32.xlu0 %v513
    %v515 = vpop.xlane.xlu0 %514
    %v516 = vsel %vm375, %v469, 0.0
    %517 = vadd.xlane.f32.xlu0 %v516
    %v518 = vpop.xlane.xlu0 %517
    %v519 = vsel %vm375, %v470, 0.0
    %520 = vadd.xlane.f32.xlu0 %v519
    %v521 = vpop.xlane.xlu0 %520
    %v522 = vsel %vm375, %v471, 0.0
    %523 = vadd.xlane.f32.xlu0 %v522
    %v524 = vpop.xlane.xlu0 %523
    %v525 = vsel %vm375, %v472, 0.0
    %526 = vadd.xlane.f32.xlu0 %v525
    %v527 = vpop.xlane.xlu0 %526
    %v528 = vsel %vm375, %v473, 0.0
    %529 = vadd.xlane.f32.xlu0 %v528
    %v530 = vpop.xlane.xlu0 %529
    %v531 = vsel %vm375, %v474, 0.0
    %532 = vadd.xlane.f32.xlu0 %v531
    %v533 = vpop.xlane.xlu0 %532
    %v534 = vsel %vm375, %v475, 0.0
    %535 = vadd.xlane.f32.xlu0 %v534
    %v536 = vpop.xlane.xlu0 %535
    %v537 = vsel %vm375, %v476, 0.0
    %538 = vadd.xlane.f32.xlu0 %v537
    %v539 = vpop.xlane.xlu0 %538
    %v540 = vsel %vm375, %v477, 0.0
    %541 = vadd.xlane.f32.xlu0 %v540
    %v542 = vpop.xlane.xlu0 %541
    %v543 = vsel %vm375, %v478, 0.0
    %544 = vadd.xlane.f32.xlu0 %v543
    %v545 = vpop.xlane.xlu0 %544
    %v546 = vsel %vm375, %v479, 0.0
    %547 = vadd.xlane.f32.xlu0 %v546
    %v548 = vpop.xlane.xlu0 %547
    %v549 = vsel %vm375, %v480, 0.0
    %550 = vadd.xlane.f32.xlu0 %v549
    %v551 = vpop.xlane.xlu0 %550
    %v552 = vsel %vm375, %v481, 0.0
    %553 = vadd.xlane.f32.xlu0 %v552
    %v554 = vpop.xlane.xlu0 %553
    %v555 = vsel %vm375, %v482, 0.0
    %556 = vadd.xlane.f32.xlu0 %v555
    %v557 = vpop.xlane.xlu0 %556
    %v558 = vmax.f32 %v378, 1e-24
    %v559 = vmax.f32 %v381, 1e-24
    %v560 = vmax.f32 %v384, 1e-24
    %v561 = vmax.f32 %v387, 1e-24
    %v562 = vmax.f32 %v390, 1e-24
    %v563 = vmax.f32 %v393, 1e-24
    %v564 = vmax.f32 %v396, 1e-24
    %v565 = vmax.f32 %v399, 1e-24
    %v566 = vmax.f32 %v402, 1e-24
    %v567 = vmax.f32 %v405, 1e-24
    %v568 = vmax.f32 %v408, 1e-24
    %v569 = vmax.f32 %v411, 1e-24
    %v570 = vmax.f32 %v414, 1e-24
    %v571 = vmax.f32 %v417, 1e-24
    %v572 = vmax.f32 %v420, 1e-24
    %v573 = vmax.f32 %v423, 1e-24
    %v574 = vmax.f32 %v426, 1e-24
    %v575 = vmax.f32 %v429, 1e-24
    %v576 = vmax.f32 %v432, 1e-24
    %v577 = vmax.f32 %v435, 1e-24
    %v578 = vmax.f32 %v438, 1e-24
    %v579 = vmax.f32 %v441, 1e-24
    %v580 = vmax.f32 %v444, 1e-24
    %v581 = vmax.f32 %v447, 1e-24
    %v582 = vmax.f32 %v450, 1e-24
    %v583 = vrsqrt.pop %v558
    %v584 = vrsqrt.pop %v559
    %v585 = vrsqrt.pop %v560
    %v586 = vrsqrt.pop %v561
    %v587 = vrsqrt.pop %v562
    %v588 = vrsqrt.pop %v563
    %v589 = vrsqrt.pop %v564
    %v590 = vrsqrt.pop %v565
    %v591 = vrsqrt.pop %v566
    %v592 = vrsqrt.pop %v567
    %v593 = vrsqrt.pop %v568
    %v594 = vrsqrt.pop %v569
    %v595 = vrsqrt.pop %v570
    %v596 = vrsqrt.pop %v571
    %v597 = vrsqrt.pop %v572
    %v598 = vrsqrt.pop %v573
    %v599 = vrsqrt.pop %v574
    %v600 = vrsqrt.pop %v575
    %v601 = vrsqrt.pop %v576
    %v602 = vrsqrt.pop %v577
    %v603 = vrsqrt.pop %v578
    %v604 = vrsqrt.pop %v579
    %v605 = vrsqrt.pop %v580
    %v606 = vrsqrt.pop %v581
    %v607 = vrsqrt.pop %v582
    %v608 = vmul.f32 %v485, %v583
    %v609 = vmul.f32 %v488, %v584
    %v610 = vmul.f32 %v491, %v585
    %v611 = vmul.f32 %v494, %v586
    %v612 = vmul.f32 %v497, %v587
    %v613 = vmul.f32 %v500, %v588
    %v614 = vmul.f32 %v503, %v589
    %v615 = vmul.f32 %v506, %v590
    %v616 = vmul.f32 %v509, %v591
    %v617 = vmul.f32 %v512, %v592
    %v618 = vmul.f32 %v515, %v593
    %v619 = vmul.f32 %v518, %v594
    %v620 = vmul.f32 %v521, %v595
    %v621 = vmul.f32 %v524, %v596
    %v622 = vmul.f32 %v527, %v597
    %v623 = vmul.f32 %v530, %v598
    %v624 = vmul.f32 %v533, %v599
    %v625 = vmul.f32 %v536, %v600
    %v626 = vmul.f32 %v539, %v601
    %v627 = vmul.f32 %v542, %v602
    %v628 = vmul.f32 %v545, %v603
    %v629 = vmul.f32 %v548, %v604
    %v630 = vmul.f32 %v551, %v605
    %v631 = vmul.f32 %v554, %v606
    %v632 = vmul.f32 %v557, %v607
    %v633 = vld [vmem:[#allocation2] sm:$0x1]
    %v635 = vlaneseq
    %v636 = vshrl.u32 %v635, 7
    %v637 = vsub.s32 0, %v636
    %v638 = vrot.slane %v633, %v637
    %v640 = vadd.f32 %v608, %v638
    %v641 = vadd.f32 %v609, %v638
    %v642 = vadd.f32 %v610, %v638
    %v643 = vadd.f32 %v611, %v638
    %v644 = vadd.f32 %v612, %v638
    %v645 = vadd.f32 %v613, %v638
    %v646 = vadd.f32 %v614, %v638
    %v647 = vadd.f32 %v615, %v638
    %v648 = vadd.f32 %v616, %v638
    %v649 = vadd.f32 %v617, %v638
    %v650 = vadd.f32 %v618, %v638
    %v651 = vadd.f32 %v619, %v638
    %v652 = vadd.f32 %v620, %v638
    %v653 = vadd.f32 %v621, %v638
    %v654 = vadd.f32 %v622, %v638
    %v655 = vadd.f32 %v623, %v638
    %v656 = vadd.f32 %v624, %v638
    %v657 = vadd.f32 %v625, %v638
    %v658 = vadd.f32 %v626, %v638
    %v659 = vadd.f32 %v627, %v638
    %v660 = vadd.f32 %v628, %v638
    %v661 = vadd.f32 %v629, %v638
    %v662 = vadd.f32 %v630, %v638
    %v663 = vadd.f32 %v631, %v638
    %v664 = vadd.f32 %v632, %v638
    %665 = vxpose.xlu0.b32.start [1/16] %v640, 128
    %666 = vxpose.xlu0.b32.cont [2/16] %v641, 128
    %667 = vxpose.xlu0.b32.cont [3/16] %v642, 128
    %668 = vxpose.xlu0.b32.cont [4/16] %v643, 128
    %669 = vxpose.xlu0.b32.cont [5/16] %v644, 128
    %670 = vxpose.xlu0.b32.cont [6/16] %v645, 128
    %671 = vxpose.xlu0.b32.cont [7/16] %v646, 128
    %672 = vxpose.xlu0.b32.cont [8/16] %v647, 128
    %673 = vxpose.xlu0.b32.cont [9/16] %v648, 128
    %674 = vxpose.xlu0.b32.cont [10/16] %v649, 128
    %675 = vxpose.xlu0.b32.cont [11/16] %v650, 128
    %676 = vxpose.xlu0.b32.cont [12/16] %v651, 128
    %677 = vxpose.xlu0.b32.cont [13/16] %v652, 128
    %678 = vxpose.xlu0.b32.cont [14/16] %v653, 128
    %679 = vxpose.xlu0.b32.cont [15/16] %v654, 128
    %680 = vxpose.xlu0.b32.end [16/16] %v655, 128
    %v681 = vpop.trf.xlu0
    %v682 = vpop.trf.xlu0
    %v683 = vpop.trf.xlu0
    %v684 = vpop.trf.xlu0
    %v685 = vpop.trf.xlu0
    %v686 = vpop.trf.xlu0
    %v687 = vpop.trf.xlu0
    %v688 = vpop.trf.xlu0
    %v689 = vpop.trf.xlu0
    %v690 = vpop.trf.xlu0
    %v691 = vpop.trf.xlu0
    %v692 = vpop.trf.xlu0
    %v693 = vpop.trf.xlu0
    %v694 = vpop.trf.xlu0
    %v695 = vpop.trf.xlu0
    %v696 = vpop.trf.xlu0
    %697 = vxpose.xlu0.b32.start [1/16] %v656, 128
    %698 = vxpose.xlu0.b32.cont [2/16] %v657, 128
    %699 = vxpose.xlu0.b32.cont [3/16] %v658, 128
    %700 = vxpose.xlu0.b32.cont [4/16] %v659, 128
    %701 = vxpose.xlu0.b32.cont [5/16] %v660, 128
    %702 = vxpose.xlu0.b32.cont [6/16] %v661, 128
    %703 = vxpose.xlu0.b32.cont [7/16] %v662, 128
    %704 = vxpose.xlu0.b32.cont [8/16] %v663, 128
    %705 = vxpose.xlu0.b32.cont [9/16] %v664, 128
    %706 = vxpose.xlu0.b32.cont [10/16] 0.0, 128
    %707 = vxpose.xlu0.b32.cont [11/16] 0.0, 128
    %708 = vxpose.xlu0.b32.cont [12/16] 0.0, 128
    %709 = vxpose.xlu0.b32.cont [13/16] 0.0, 128
    %710 = vxpose.xlu0.b32.cont [14/16] 0.0, 128
    %711 = vxpose.xlu0.b32.cont [15/16] 0.0, 128
    %712 = vxpose.xlu0.b32.end [16/16] 0.0, 128
    %v713 = vpop.trf.xlu0
    %v714 = vpop.trf.xlu0
    %v715 = vpop.trf.xlu0
    %v716 = vpop.trf.xlu0
    %v717 = vpop.trf.xlu0
    %v718 = vpop.trf.xlu0
    %v719 = vpop.trf.xlu0
    %v720 = vpop.trf.xlu0
    %v721 = vpop.trf.xlu0
    %v722 = vpop.trf.xlu0
    %v723 = vpop.trf.xlu0
    %v724 = vpop.trf.xlu0
    %v725 = vpop.trf.xlu0
    %v726 = vpop.trf.xlu0
    %v727 = vpop.trf.xlu0
    %v728 = vpop.trf.xlu0
    %v731 = vcombine.low %v681, %v713
    %v733 = vunpack.c.l.s4 1966171168
    %v734 = vunpack.c.0.s8 %v733
    %v735 = vlaneseq
    %v736 = vshrl.u32 %v735, 7
    %v737 = vsub.s32 %v734, %v736
    %v738 = vrot.slane %v731, %v737
    %v740 = vunpack.c.l.s4 1966171168
    %v741 = vunpack.c.0.s8 %v740
    %v742 = vlaneseq
    %v743 = vshrl.u32 %v742, 7
    %v744 = vsub.s32 %v741, %v743
    %v745 = vrot.slane %v738, %v744
    %v747 = vlaneseq
    %vm748 = vcmp.ge.s32.totalorder %v747, 0
    %vm749 = vcmp.lt.s32.totalorder %v747, 200
    %vm750 = vmand %vm748, %vm749
    %751 = vst.msk [vmem:[#allocation3] sm:$0x3] %vm750, %v745
    // Predicated region
    $region22: #{gnn_inductive_node_head.1} parent=1 // pred_check
      _
    $region23: #{gnn_inductive_node_head.1} parent=1 // pred_check_branch
      %753 = sbr.rel (0) target = $region25
    $region24: #{gnn_inductive_node_head.1} parent=1 // pred_region
      %s755 = ssub.s32 32, 32
      %756 = vsyncadd [#allocation4], %s755
      %s758 = sshll.u32 [#allocation3], 4
      %s759 = int_to_ptr.vmem [resolvable:$true] %s758
      %761 = dma.vmem_to_hbm [thread:$0]  %s759, 32, %s5, [#allocation4]
    $region25: #{gnn_inductive_node_head.1} parent=1 // pred_fallthru
      _
    // Predicated region
    $region26: #{gnn_inductive_node_head.1} parent=1 // pred_check
      _
    $region27: #{gnn_inductive_node_head.1} parent=1 // pred_check_branch
      %763 = sbr.rel (0) target = $region29
    $region28: #{gnn_inductive_node_head.1} parent=1 // pred_region
      %764 = dma.done [#allocation4], 32
    $region29: #{gnn_inductive_node_head.1} parent=1 // pred_fallthru
      _
    %765 = vsyncpa [#allocation4], 1

</llo_original>
